<compile_context>
chip_gen: v7x
topology: tpu7x:2x2x1
jax: 0.10.0
libtpu: 0.0.40
codegen_flags: <defaults>
</compile_context>

<pallas_src>
import jax
import jax.numpy as jnp
import numpy as np
from jax.experimental import pallas as pl
from jax.experimental.pallas import tpu as pltpu


def _round_up(a, b):
    return ((a + b - 1) // b) * b


def _perslay_ddpn_kernel(x_ref, w_ref, b_ref, o_ref):
    # x_ref: (tf, F*fold)        w_ref: (F*fold, 2*H*fold)
    # b_ref: (1, 2*H*fold) f32   o_ref: (tf, H*fold)  lane-dense
    y = jnp.dot(x_ref[...], w_ref[...], preferred_element_type=jnp.float32)
    y = y + b_ref[...]                       # bias + epilogue stay f32 (v5e VPU has no bf16)
    hw = o_ref.shape[-1]                     # H*fold (128 in the folded case)
    o_ref[...] = (y[:, :hw] * y[:, hw:]).astype(o_ref.dtype)


def perslay_ddpn(x, w_rho, b_rho, w_phi, b_phi, *, tf_max=4096,
                 compute_dtype=jnp.float32, out_dtype=jnp.float32):
    """PersLay_DDPN forward: rho(x) * phi(x[..., 3:]) with Linear rho / phi.

    x: (B, N, F) float32 -> (B, N, H) out_dtype
    """
    B, N, F = x.shape
    H = w_rho.shape[1]
    M = B * N

    # Fold several logical output rows into one 128-lane output row when H | 128.
    fold = 128 // H if (H < 128 and 128 % H == 0) else 1

    # ---- tile selection (in folded rows) -------------------------------------
    M_f = pl.cdiv(M, fold)
    if M_f < 512:
        # Tiny problem: single block; launch-overhead dominated anyway.
        tf = _round_up(M_f, 8)
    else:
        # >= 2 grid steps so v7x's two TensorCores both get work on the
        # "parallel" axis; capped at tf_max so the working set (~tf * 3.25 KiB)
        # stays inside every chip's scoped VMEM budget.
        tf = min(tf_max, _round_up(pl.cdiv(M_f, 2), 8))
    M_fp = _round_up(M_f, tf)                # pad so every block is full
    grid = (M_fp // tf,)

    # ---- input prep: zero-pad rows, then fold (free, contiguous reshape) -----
    x2d = x.reshape(M, F)
    pad_rows = M_fp * fold - M
    if pad_rows:
        x2d = jnp.pad(x2d, ((0, pad_rows), (0, 0)))
    x_fold = x2d.reshape(M_fp, F * fold).astype(compute_dtype)

    # ---- weight prep: zero-pad W_phi, block-diagonal fold, rho/phi fusion ----
    w_phi_pad = jnp.concatenate([jnp.zeros((3, H), w_phi.dtype), w_phi], axis=0)
    eye = jnp.eye(fold, dtype=w_rho.dtype)
    w_cat = jnp.concatenate(
        [jnp.kron(eye, w_rho), jnp.kron(eye, w_phi_pad)], axis=1
    ).astype(compute_dtype)                                  # (F*fold, 2*H*fold)
    b_cat = jnp.concatenate(
        [jnp.tile(b_rho, fold), jnp.tile(b_phi, fold)]
    ).reshape(1, 2 * H * fold).astype(jnp.float32)           # bias added in f32

    Kd = F * fold            # 32 at the demo size
    Ld = H * fold            # 128 at the demo size

    in_bytes = np.dtype(compute_dtype).itemsize
    out_bytes = np.dtype(out_dtype).itemsize
    cost = pl.CostEstimate(
        flops=2 * M_fp * Kd * (2 * Ld) + M_fp * Ld,
        transcendentals=0,
        bytes_accessed=(M_fp * Kd * in_bytes            # x read
                        + Kd * 2 * Ld * in_bytes        # weights
                        + 2 * Ld * 4                    # bias
                        + M_fp * Ld * out_bytes),       # output write
    )

    out = pl.pallas_call(
        _perslay_ddpn_kernel,
        out_shape=jax.ShapeDtypeStruct((M_fp, Ld), out_dtype),
        grid=grid,
        in_specs=[
            # Streamed x tiles (double-buffered by Pallas).  If xprof ever shows
            # exposed DMA on v7x, bump with pipeline_mode=pl.Buffered(3).
            pl.BlockSpec((tf, Kd), lambda i: (i, 0)),
            # Fused block-diagonal weights / bias stay VMEM-resident.
            pl.BlockSpec((Kd, 2 * Ld), lambda i: (0, 0)),
            pl.BlockSpec((1, 2 * Ld), lambda i: (0, 0)),
        ],
        out_specs=pl.BlockSpec((tf, Ld), lambda i: (i, 0)),
        compiler_params=pltpu.CompilerParams(
            dimension_semantics=("parallel",),           # v7x: shard tiles over 2 TCs
            vmem_limit_bytes=32 * 1024 * 1024,           # safe on v5e/v6e/v7x
        ),
        cost_estimate=cost,
    )(x_fold, w_cat, b_cat)

    # Unfold (contiguous reshape), trim padding, restore (B, N, H).
    out = out.reshape(M_fp * fold, H)[:M]
    return out.reshape(B, N, H)


def _reference(x, w_rho, b_rho, w_phi, b_phi):
    rho = jnp.einsum("bnf,fh->bnh", x, w_rho) + b_rho
    phi = jnp.einsum("bnf,fh->bnh", x[..., 3:], w_phi) + b_phi
    return rho * phi


if __name__ == "__main__":
    B, N, F, H = 2, 16, 8, 32  # batch, points per diagram, point features, hidden

    key = jax.random.PRNGKey(0)
    kx, kwr, kbr, kwp, kbp = jax.random.split(key, 5)

    x = jax.random.normal(kx, (B, N, F), dtype=jnp.float32)
    w_rho = jax.random.normal(kwr, (F, H), dtype=jnp.float32) * (1.0 / jnp.sqrt(F))
    b_rho = jax.random.normal(kbr, (H,), dtype=jnp.float32) * 0.1
    w_phi = jax.random.normal(kwp, (F - 3, H), dtype=jnp.float32) * (1.0 / jnp.sqrt(F - 3))
    b_phi = jax.random.normal(kbp, (H,), dtype=jnp.float32) * 0.1

    out = perslay_ddpn(x, w_rho, b_rho, w_phi, b_phi)
    out = jax.block_until_ready(out)

    ref = _reference(x, w_rho, b_rho, w_phi, b_phi)
    assert out.shape == (B, N, H)
    assert jnp.allclose(out, ref, atol=1e-5, rtol=1e-5), "mismatch vs reference"

    print("KERNEL_OK")
</pallas_src>

<mosaic_0001>
module attributes {stable_mosaic.version = 11 : i64} {
  func.func @_perslay_ddpn_kernel(%arg0: i32, %arg1: memref<8x32xf32, #tpu.memory_space<vmem>>, %arg2: memref<32x256xf32, #tpu.memory_space<vmem>>, %arg3: memref<1x256xf32, #tpu.memory_space<vmem>>, %arg4: memref<8x128xf32, #tpu.memory_space<vmem>>) attributes {dimension_semantics = [#tpu.dimension_semantics<parallel>], iteration_bounds = array<i64: 1>, scalar_prefetch = 0 : i64, scratch_operands = 0 : i64, tpu.core_type = #tpu.core_type<tc>, window_params = [{transform_indices = @transform_0, window_bounds = array<i64: 8, 32>}, {pipeline_mode = #tpu.pipeline_mode<synchronous>, transform_indices = @transform_1, window_bounds = array<i64: 32, 256>}, {pipeline_mode = #tpu.pipeline_mode<synchronous>, transform_indices = @transform_2, window_bounds = array<i64: 1, 256>}, {transform_indices = @transform_3, window_bounds = array<i64: 8, 128>}]} {
    %c0 = arith.constant 0 : index
    %c0_0 = arith.constant 0 : index
    %0 = vector.load %arg1[%c0, %c0_0] : memref<8x32xf32, #tpu.memory_space<vmem>>, vector<8x32xf32>
    %c0_1 = arith.constant 0 : index
    %c0_2 = arith.constant 0 : index
    %1 = vector.load %arg2[%c0_1, %c0_2] : memref<32x256xf32, #tpu.memory_space<vmem>>, vector<32x256xf32>
    %cst = arith.constant dense<0.000000e+00> : vector<8x256xf32>
    %2 = tpu.matmul %0, %1, %cst {dimension_numbers = #tpu.dot_dimension_numbers<[1], [0], [0], [1], [0, 0, 1, 1], [], []>} : vector<8x32xf32>, vector<32x256xf32>, vector<8x256xf32> -> vector<8x256xf32>
    %c0_3 = arith.constant 0 : index
    %c0_4 = arith.constant 0 : index
    %3 = vector.load %arg3[%c0_3, %c0_4] : memref<1x256xf32, #tpu.memory_space<vmem>>, vector<1x256xf32>
    %4 = vector.broadcast %3 : vector<1x256xf32> to vector<8x256xf32>
    %5 = arith.addf %2, %4 : vector<8x256xf32>
    %6 = vector.extract_strided_slice %5 {offsets = [0, 0], sizes = [8, 128], strides = [1, 1]} : vector<8x256xf32> to vector<8x128xf32>
    %7 = vector.extract_strided_slice %5 {offsets = [0, 128], sizes = [8, 128], strides = [1, 1]} : vector<8x256xf32> to vector<8x128xf32>
    %8 = arith.mulf %6, %7 : vector<8x128xf32>
    %c0_5 = arith.constant 0 : index
    %c0_6 = arith.constant 0 : index
    %9 = vector.load %arg4[%c0_5, %c0_6] : memref<8x128xf32, #tpu.memory_space<vmem>>, vector<8x128xf32>
    tpu.vector_store %arg4[%c0_5, %c0_6], %8 {strides = array<i32>} : memref<8x128xf32, #tpu.memory_space<vmem>>, vector<8x128xf32>,
    return
  }
  func.func @transform_0(%arg0: i32) -> (i32, i32) {
    %c0_i32 = arith.constant 0 : i32
    %c0_i32_0 = arith.constant 0 : i32
    return %arg0, %c0_i32 : i32, i32
  }
  func.func @transform_1(%arg0: i32) -> (i32, i32) {
    %c0_i32 = arith.constant 0 : i32
    %c0_i32_0 = arith.constant 0 : i32
    %c0_i32_1 = arith.constant 0 : i32
    return %c0_i32, %c0_i32_0 : i32, i32
  }
  func.func @transform_2(%arg0: i32) -> (i32, i32) {
    %c0_i32 = arith.constant 0 : i32
    %c0_i32_0 = arith.constant 0 : i32
    %c0_i32_1 = arith.constant 0 : i32
    return %c0_i32, %c0_i32_0 : i32, i32
  }
  func.func @transform_3(%arg0: i32) -> (i32, i32) {
    %c0_i32 = arith.constant 0 : i32
    %c0_i32_0 = arith.constant 0 : i32
    return %arg0, %c0_i32 : i32, i32
  }
}

</mosaic_0001>

<llo_original>
// kernel: tpu_custom_call.1
$region0: #{tpu_custom_call.1}
  #allocation0 [shape = 'u32[]', space=smem, size = 0x4, offset = 0x4, fixed_abs, tag = 'smem constant byte address 0x4 - core index']
  #allocation1 [shape = 'u32[144,128]{1,0:T(1,128)}', space=vmem, size = 0x12000, scoped, tag = 'internal scratch']
  %s0 = inlined_call_operand.hbm [shape: f32[8,32], index: 0, kind: input, shape index: {}]
  %s1 = inlined_call_operand.hbm [shape: f32[32,256], index: 1, kind: input, shape index: {}]
  %s2 = inlined_call_operand.vmem [shape: f32[1,256], index: 2, kind: input, shape index: {}]
  %s3 = inlined_call_operand.hbm [shape: f32[8,128], index: 3, kind: output, shape index: {}]
  %s4 = sld [smem:[#allocation0]]
  $region30: #{tpu_custom_call.1} parent=0
    _
  %s6 = ssub.s32 1, %s4
  %s7 = scalar_select 0, %s6, %s4
  $region1: #{tpu_custom_call.1} parent=0
    #allocation2 [shape = 'u8[4096]{0}', space=vmem, size = 0x1000, scoped, tag = 'input window, operand 0, single buffered']
    #allocation3 [shape = 's32[1]{0}', space=sflag, size = 0x4, scoped, tag = 'scoped memory for tpu_custom_call.1']
    #allocation4 [shape = 's32[1]{0}', space=sflag, size = 0x4, scoped, tag = 'scoped memory for tpu_custom_call.1']
    #allocation5 [shape = 'u8[32768]{0}', space=vmem, size = 0x8000, scoped, tag = 'input window, operand 1, single buffered']
    #allocation6 [shape = 's32[1]{0}', space=sflag, size = 0x4, scoped, tag = 'scoped memory for tpu_custom_call.1']
    #allocation7 [shape = 'u8[4096]{0}', space=vmem, size = 0x1000, scoped, tag = 'output window, operand 0, single buffered']
    %8 = vsyncpa [#allocation3], 0
    %9 = vsyncpa [#allocation6], 0
    %10 = vsyncpa [#allocation4], 0
    // Predicated region
    $region2: #{tpu_custom_call.1} parent=1 // pred_check
      _
    $region3: #{tpu_custom_call.1} parent=1 // pred_check_branch
      %12 = sbr.rel (0) target = $region5
    $region4: #{tpu_custom_call.1} parent=1 // pred_region
      %s14 = ssub.s32 128, 128
      %15 = vsyncadd [#allocation3], %s14
      %s17 = sshll.u32 [#allocation2], 4
      %s18 = int_to_ptr.vmem [resolvable:$true] %s17
      %20 = dma.hbm_to_vmem [thread:$0]  %s0, 128, %s18, [#allocation3]
    $region5: #{tpu_custom_call.1} parent=1 // pred_fallthru
      _
    // Predicated region
    $region6: #{tpu_custom_call.1} parent=1 // pred_check
      _
    $region7: #{tpu_custom_call.1} parent=1 // pred_check_branch
      %22 = sbr.rel (0) target = $region9
    $region8: #{tpu_custom_call.1} parent=1 // pred_region
      %s24 = ssub.s32 1024, 1024
      %25 = vsyncadd [#allocation6], %s24
      %s26 = sshll.u32 [#allocation5], 4
      %s27 = int_to_ptr.vmem [resolvable:$true] %s26
      %32 = dma.hbm_to_vmem [thread:$0]  %s1, 1024, %s27, [#allocation6], 256, 256, 16
    $region9: #{tpu_custom_call.1} parent=1 // pred_fallthru
      _
    // Predicated region
    $region10: #{tpu_custom_call.1} parent=1 // pred_check
      _
    $region11: #{tpu_custom_call.1} parent=1 // pred_check_branch
      %34 = sbr.rel (0) target = $region13
    $region12: #{tpu_custom_call.1} parent=1 // pred_region
      _
    $region13: #{tpu_custom_call.1} parent=1 // pred_fallthru
      _
    // Predicated region
    $region14: #{tpu_custom_call.1} parent=1 // pred_check
      _
    $region15: #{tpu_custom_call.1} parent=1 // pred_check_branch
      %36 = sbr.rel (0) target = $region17
    $region16: #{tpu_custom_call.1} parent=1 // pred_region
      %37 = dma.done [#allocation3], 128
    $region17: #{tpu_custom_call.1} parent=1 // pred_fallthru
      _
    // Predicated region
    $region18: #{tpu_custom_call.1} parent=1 // pred_check
      _
    $region19: #{tpu_custom_call.1} parent=1 // pred_check_branch
      %39 = sbr.rel (0) target = $region21
    $region20: #{tpu_custom_call.1} parent=1 // pred_region
      %40 = dma.done [#allocation6], 1024
    $region21: #{tpu_custom_call.1} parent=1 // pred_fallthru
      _
    %v41 = vld [vmem:[#allocation2] sm:$0xff]
    %v42 = vld [vmem:[#allocation5] sm:$0xff]
    %v43 = vld [vmem:[#allocation5 + $0x8] sm:$0xff]
    %v44 = vld [vmem:[#allocation5 + $0x10] sm:$0xff]
    %v45 = vld [vmem:[#allocation5 + $0x18] sm:$0xff]
    %v46 = vld [vmem:[#allocation5 + $0x20] sm:$0xff]
    %v47 = vld [vmem:[#allocation5 + $0x28] sm:$0xff]
    %v48 = vld [vmem:[#allocation5 + $0x30] sm:$0xff]
    %v49 = vld [vmem:[#allocation5 + $0x38] sm:$0xff]
    %v50 = vld [vmem:[%s2] sm:$0x3]
    %v52 = vlaneseq
    %v53 = vshrl.u32 %v52, 7
    %v54 = vsub.s32 0, %v53
    %v55 = vrot.slane %v50, %v54
    %v56 = vlaneseq
    %v57 = vshrl.u32 %v56, 7
    %v58 = vsub.s32 1, %v57
    %v59 = vrot.slane %v50, %v58
    %vm62 = vcmask 261120
    %v64 = vsel %vm62, %v41, 0
    %66 = vmatprep.subr.mxu0 %v43
    %67 = vmatpush1.msra.mxu0 %v42
    %68 = vmatprep.subr.mxu0 %v45
    %69 = vmatpush1.msra.mxu0 %v44
    %70 = vmatprep.subr.mxu0 %v47
    %71 = vmatpush1.msra.mxu0 %v46
    %72 = vmatprep.subr.mxu0 %v49
    %73 = vmatpush1.msra.mxu0 %v48
    %74 = vmatprep.subr.mxu0 0.0
    %75 = vmatpush1.msra.mxu0 0.0
    %76 = vmatprep.subr.mxu0 0.0
    %77 = vmatpush1.msra.mxu0 0.0
    %78 = vmatprep.subr.mxu0 0.0
    %79 = vmatpush1.msra.mxu0 0.0
    %80 = vmatprep.subr.mxu0 0.0
    %81 = vmatpush1.msra.mxu0 0.0
    %82 = vmatprep.subr.mxu0 0.0
    %83 = vmatpush1.msra.mxu0 0.0
    %84 = vmatprep.subr.mxu0 0.0
    %85 = vmatpush1.msra.mxu0 0.0
    %86 = vmatprep.subr.mxu0 0.0
    %87 = vmatpush1.msra.mxu0 0.0
    %88 = vmatprep.subr.mxu0 0.0
    %89 = vmatpush1.msra.mxu0 0.0
    %90 = vmatprep.subr.mxu0 0.0
    %91 = vmatpush1.msra.mxu0 0.0
    %92 = vmatprep.subr.mxu0 0.0
    %93 = vmatpush1.msra.mxu0 0.0
    %94 = vmatprep.subr.mxu0 0.0
    %95 = vmatpush1.msra.mxu0 0.0
    %96 = vmatprep.subr.mxu0 0.0
    %97 = vmatpush1.msra.mxu0 0.0
    %98 = vmatprep.subr.mxu0 0.0
    %99 = vmatpush1.msra.mxu0 0.0
    %100 = vmatprep.subr.mxu0 0.0
    %101 = vmatpush1.msra.mxu0 0.0
    %102 = vmatprep.subr.mxu0 0.0
    %103 = vmatpush1.msra.mxu0 0.0
    %104 = vmatprep.subr.mxu0 0.0
    %105 = vmatpush1.msra.mxu0 0.0
    %106 = vmatprep.subr.mxu0 0.0
    %107 = vmatpush1.msra.mxu0 0.0
    %108 = vmatprep.subr.mxu0 0.0
    %109 = vmatpush1.msra.mxu0 0.0
    %110 = vmatprep.subr.mxu0 0.0
    %111 = vmatpush1.msra.mxu0 0.0
    %112 = vmatprep.subr.mxu0 0.0
    %113 = vmatpush1.msra.mxu0 0.0
    %114 = vmatprep.subr.mxu0 0.0
    %115 = vmatpush1.msra.mxu0 0.0
    %116 = vmatprep.subr.mxu0 0.0
    %117 = vmatpush1.msra.mxu0 0.0
    %118 = vmatprep.subr.mxu0 0.0
    %119 = vmatpush1.msra.mxu0 0.0
    %120 = vmatprep.subr.mxu0 0.0
    %121 = vmatpush1.msra.mxu0 0.0
    %122 = vmatprep.subr.mxu0 0.0
    %123 = vmatpush1.msra.mxu0 0.0
    %124 = vmatprep.subr.mxu0 0.0
    %125 = vmatpush1.msra.mxu0 0.0
    %126 = vmatprep.subr.mxu0 0.0
    %127 = vmatpush1.msra.mxu0 0.0
    %128 = vmatprep.subr.mxu0 0.0
    %129 = vmatpush1.msra.mxu0 0.0
    %130 = vmatprep.mubr.f32.mxu0 0.0
    %131 = vmatmul.mubr.f32.gmra.mrb[0].mxu0 %v64
    %v132 = vpop.f32.mrb[0].mxu0
    %v133 = vadd.f32 %v55, %v132
    %v134 = vpop.f32.mrb[0].mxu0
    %v135 = vadd.f32 %v59, %v134
    %136 = vdwg.mxu0
    %v137 = vmul.f32 %v133, %v135
    %138 = vst [vmem:[#allocation7] sm:$0xff] %v137
    // Predicated region
    $region22: #{tpu_custom_call.1} parent=1 // pred_check
      _
    $region23: #{tpu_custom_call.1} parent=1 // pred_check_branch
      %140 = sbr.rel (0) target = $region25
    $region24: #{tpu_custom_call.1} parent=1 // pred_region
      %s142 = ssub.s32 128, 128
      %143 = vsyncadd [#allocation4], %s142
      %s145 = sshll.u32 [#allocation7], 4
      %s146 = int_to_ptr.vmem [resolvable:$true] %s145
      %148 = dma.vmem_to_hbm [thread:$0]  %s146, 128, %s3, [#allocation4]
    $region25: #{tpu_custom_call.1} parent=1 // pred_fallthru
      _
    // Predicated region
    $region26: #{tpu_custom_call.1} parent=1 // pred_check
      _
    $region27: #{tpu_custom_call.1} parent=1 // pred_check_branch
      %150 = sbr.rel (0) target = $region29
    $region28: #{tpu_custom_call.1} parent=1 // pred_region
      %151 = dma.done [#allocation4], 128
    $region29: #{tpu_custom_call.1} parent=1 // pred_fallthru
      _
    %152 = vsyncpa [#allocation3], 1
    %153 = vsyncpa [#allocation6], 1
    %154 = vsyncpa [#allocation4], 1

</llo_original>
